<compile_context>
chip_gen: v5e
topology: v5e:2x2
jax: 0.10.0
libtpu: 0.0.40
codegen_flags: <defaults>
</compile_context>

<pallas_src>
from functools import partial

import jax
import jax.numpy as jnp
from jax import lax
from jax.experimental import pallas as pl
from jax.experimental.pallas import tpu as pltpu

LANE = 128


def _round_up(n, m):
    return ((n + m - 1) // m) * m


def _pick_batch_tile(batch, rows_per_sample, max_rows=1024, min_grid=2):
    """Pick samples-per-tile d: d | batch, block rows (d*rows_per_sample) sublane-aligned
    (or the whole array), rows <= max_rows.  The kernel is HBM-bound, so bigger tiles win
    (amortize ~0.35us/step); prefer a grid of >= min_grid steps so v7x's 2 TCs share work."""
    best = None
    for d in range(1, batch + 1):
        if batch % d:
            continue
        rows = d * rows_per_sample
        aligned = (rows % 8 == 0) or (d == batch)
        if not aligned:
            continue
        key = (rows <= max_rows, (batch // d) >= min_grid, rows)
        if best is None or key > best[0]:
            best = (key, d)
    return best[1] if best is not None else batch


def _vmem_limit(*block_bytes):
    """Explicit VMEM budget: double-buffered blocks + slack, capped under v7x's 64 MiB."""
    need = 2 * sum(int(b) for b in block_bytes)
    return int(min(max(2 * need, 32 << 20), 56 << 20))


# --------------------------------------------------------------------------------------
# Kernels (one per max_layer path; no dead outputs)
# --------------------------------------------------------------------------------------
def _layer1_kernel(thr_ref, x_ref, w1_ref, spk_ref, pot_ref):
    """conv1 (full-field conv == matmul) + sf.fire(pot, conv1_t, True)."""
    thr = thr_ref[0, 0]                                               # SMEM scalar (no recompiles)
    # x arrives f32 (no extra wrapper cast pass); cast to bf16 on the VPU, accumulate f32 on MXU.
    pot = jnp.dot(x_ref[...].astype(jnp.bfloat16), w1_ref[...],
                  preferred_element_type=jnp.float32)
    fired = pot > thr                                                 # compare on f32 accumulator
    pot_ref[...] = jnp.where(fired, pot, 0.0)                         # threshold_(pot, thr), f32
    spk_ref[...] = fired.astype(spk_ref.dtype)                        # 0/1 spikes, exact in bf16


def _decision_kernel(thr_ref, x_ref, w1_ref, w3_ref, dec_ref, *, T, n_classes):
    """conv1 -> fire(conv1_t) -> conv3 -> fire() -> get_k_winners(kwta=1) -> decision.
    x_ref holds ONLY the t = T-1 rows (one per sample): sf.fire(pot3) zeroes every other
    time step, so the earliest-spike gather in get_k_winners resolves to t = T-1."""
    thr = thr_ref[0, 0]
    bt = dec_ref.shape[0]
    cpad = w3_ref.shape[1]

    # conv1 + fire on the last-step rows only.
    pot1 = jnp.dot(x_ref[...].astype(jnp.bfloat16), w1_ref[...],
                   preferred_element_type=jnp.float32)
    spk1 = (pot1 > thr).astype(w3_ref.dtype)                          # binary spikes, bf16

    # conv3 (1x1 conv == matmul).
    pot3 = jnp.dot(spk1, w3_ref[...], preferred_element_type=jnp.float32)   # (bt, cpad)

    # sf.fire(pot3) + sf.get_k_winners(pot3, 1, 0, spk3), collapsed to the last step.
    spk3 = jnp.sign(pot3)
    trunc = spk3 * pot3                                               # potential at the spike
    v = jnp.max(trunc, axis=-1, keepdims=True) * T                    # SpykeTorch dominance bias
    total = trunc + spk3 * v

    lane = lax.broadcasted_iota(jnp.int32, (bt, cpad), 1)
    total = jnp.where(lane < n_classes, total, -3.0e38)               # mask zero-padded lanes
    max_val = jnp.max(total, axis=-1, keepdims=True)
    winner = jnp.min(jnp.where(total == max_val, lane, cpad), axis=-1, keepdims=True)
    dec = jnp.where(max_val != 0.0, winner, -1).astype(jnp.int32)     # (bt, 1); -1 == no winner

    # decision_map is the identity (feature i -> class i); lane-dense 128-wide int32 store.
    dec_ref[...] = jnp.broadcast_to(dec, dec_ref.shape)


# --------------------------------------------------------------------------------------
# Host-side wrappers
# --------------------------------------------------------------------------------------
def prepare_weights(conv1_weight, conv3_weight):
    """One-time weight prep (hoisted out of the per-call forward): reshape conv weights to
    matmul operands, zero-pad feature/lane dims to 128 and cast to bf16 for the MXU."""
    C1, Cin, Kh, Kw = conv1_weight.shape
    Cout = conv3_weight.shape[0]
    K = Cin * Kh * Kw
    c1p = _round_up(C1, LANE)
    coutp = _round_up(Cout, LANE)
    w1 = jnp.transpose(conv1_weight.reshape(C1, K)).astype(jnp.float32)        # (K, C1)
    w1 = jnp.pad(w1, ((0, 0), (0, c1p - C1))).astype(jnp.bfloat16)             # (K, 128k)
    w3 = jnp.transpose(conv3_weight.reshape(Cout, C1)).astype(jnp.float32)     # (C1, Cout)
    w3 = jnp.pad(w3, ((0, c1p - C1), (0, coutp - Cout))).astype(jnp.bfloat16)  # (128k, 128)
    return w1, w3


@partial(jax.jit, static_argnames=("batch_tile", "vmem_limit"))
def mozafari_layer1(x, w1p, conv1_t, *, batch_tile, vmem_limit):
    """Eval forward, max_layer == 1.  Returns (spk1, pot1), each (B, T, c1p, 1, 1) in the
    padded lane layout; the real features are lanes [:n_feat1], pad lanes are exactly 0.
    spk1 is bf16 (0/1, exact), pot1 is f32."""
    B, T, Cin, H, W = x.shape
    K = Cin * H * W
    c1p = w1p.shape[1]
    rows = batch_tile * T
    x2 = x.reshape(B * T, K)                                          # contiguous collapse, no copy
    thr = jnp.reshape(conv1_t.astype(jnp.float32), (1, 1))

    spk, pot = pl.pallas_call(
        _layer1_kernel,
        out_shape=(jax.ShapeDtypeStruct((B * T, c1p), jnp.bfloat16),
                   jax.ShapeDtypeStruct((B * T, c1p), jnp.float32)),
        grid=(B // batch_tile,),
        in_specs=[
            pl.BlockSpec(memory_space=pltpu.MemorySpace.SMEM),        # conv1_t scalar
            pl.BlockSpec((rows, K), lambda b: (b, 0)),                # input rows per tile (f32)
            pl.BlockSpec((K, c1p), lambda b: (0, 0)),                 # w1 resident in VMEM
        ],
        out_specs=(pl.BlockSpec((rows, c1p), lambda b: (b, 0)),
                   pl.BlockSpec((rows, c1p), lambda b: (b, 0))),
        compiler_params=pltpu.CompilerParams(
            dimension_semantics=("parallel",),
            vmem_limit_bytes=vmem_limit),
    )(thr, x2, w1p)

    return spk.reshape(B, T, c1p, 1, 1), pot.reshape(B, T, c1p, 1, 1)


@partial(jax.jit, static_argnames=("n_classes", "batch_tile", "vmem_limit"))
def mozafari_decide(x, w1p, w3p, conv1_t, *, n_classes, batch_tile, vmem_limit):
    """Eval forward, max_layer == 3: one decision per sample, (B,) int32 (-1 = no spike)."""
    B, T, Cin, H, W = x.shape
    K = Cin * H * W
    c1p, coutp = w1p.shape[1], w3p.shape[1]
    # Only t = T-1 contributes to the decision; slice it before the kernel (tiny copy) so
    # the kernel's input DMA and conv1 work shrink by a factor of T.
    x_last = x[:, T - 1].reshape(B, K)
    thr = jnp.reshape(conv1_t.astype(jnp.float32), (1, 1))

    dec = pl.pallas_call(
        partial(_decision_kernel, T=T, n_classes=n_classes),
        out_shape=jax.ShapeDtypeStruct((B, coutp), jnp.int32),
        grid=(B // batch_tile,),
        in_specs=[
            pl.BlockSpec(memory_space=pltpu.MemorySpace.SMEM),        # conv1_t scalar
            pl.BlockSpec((batch_tile, K), lambda b: (b, 0)),          # last-step rows per tile
            pl.BlockSpec((K, c1p), lambda b: (0, 0)),                 # w1 resident
            pl.BlockSpec((c1p, coutp), lambda b: (0, 0)),             # w3 resident
        ],
        out_specs=pl.BlockSpec((batch_tile, coutp), lambda b: (b, 0)),
        compiler_params=pltpu.CompilerParams(
            dimension_semantics=("parallel",),
            vmem_limit_bytes=vmem_limit),
    )(thr, x_last, w1p, w3p)
    return dec[:, 0]


def mozafari_forward(x, w1p, w3p, conv1_t, max_layer, *, n_classes=10,
                     batch_tile=None, max_rows=1024):
    """x: (B, T, Cin, H, W) binary spike waves; w1p/w3p from prepare_weights()."""
    B, T, Cin, H, W = x.shape
    K = Cin * H * W
    c1p, coutp = w1p.shape[1], w3p.shape[1]
    conv1_t = jnp.asarray(conv1_t, jnp.float32)

    if max_layer == 1:
        bt = batch_tile if batch_tile is not None else _pick_batch_tile(B, T, max_rows=max_rows)
        if B % bt:
            raise ValueError(f"batch_tile={bt} must divide batch={B}")
        rows = bt * T
        vmem = _vmem_limit(rows * K * 4, K * c1p * 2, rows * c1p * 2, rows * c1p * 4)
        return mozafari_layer1(x, w1p, conv1_t, batch_tile=bt, vmem_limit=vmem)

    bt = batch_tile if batch_tile is not None else _pick_batch_tile(B, 1, max_rows=max_rows)
    if B % bt:
        raise ValueError(f"batch_tile={bt} must divide batch={B}")
    vmem = _vmem_limit(bt * K * 4, K * c1p * 2, c1p * coutp * 2, bt * coutp * 4)
    return mozafari_decide(x, w1p, w3p, conv1_t, n_classes=n_classes,
                           batch_tile=bt, vmem_limit=vmem)
    # TODO(synk): training-path ops (STDP/anti-STDP weight updates, pointwise_inhibition,
    # adaptive learning-rate scheduling, spk_cnt state) are stateful training logic and are
    # not part of this inference kernel.


# --------------------------------------------------------------------------------------
# Pure-JAX reference (mirrors SpykeTorch eval forward, f32 / HIGHEST precision)
# --------------------------------------------------------------------------------------
def _reference(x, w1p, w3p, conv1_t, n_feat1, n_classes):
    B, T, Cin, H, W = x.shape
    K = Cin * H * W
    w1 = w1p[:, :n_feat1].astype(jnp.float32)
    w3 = w3p[:n_feat1, :n_classes].astype(jnp.float32)
    xf = x.reshape(B, T, K).astype(jnp.float32)
    hi = lax.Precision.HIGHEST

    pot1 = jnp.einsum("btk,kc->btc", xf, w1, precision=hi)
    fired = pot1 > conv1_t
    pot1_th = jnp.where(fired, pot1, 0.0)
    spk1 = fired.astype(jnp.float32)

    pot3 = jnp.einsum("btc,cd->btd", spk1, w3, precision=hi)
    thresholded = pot3.at[:, :-1, :].set(0.0)                         # sf.fire(threshold=None)
    spk3 = jnp.sign(thresholded)
    first = jnp.clip(T - jnp.sum(spk3, axis=1), 0, T - 1).astype(jnp.int32)   # (B, Cout)
    values = jnp.take_along_axis(pot3, first[:, None, :], axis=1)             # (B, 1, Cout)
    trunc = spk3 * values
    v = jnp.max(trunc.reshape(B, -1), axis=1) * T
    trunc = trunc + spk3 * v[:, None, None]
    total = jnp.sum(trunc, axis=1)                                            # (B, Cout)
    return pot1, pot1_th, spk1, total


if __name__ == "__main__":
    key = jax.random.PRNGKey(0)
    # Small shapes consistent with the module structure (conv1 kernel == full field -> 1x1
    # spatial output; conv3 is 1x1): B samples, T time steps, 1 input channel, 16x16 field.
    B, T, Cin, H, W = 32, 8, 1, 16, 16
    C1, Cout = 64, 10

    k1, k2, k3 = jax.random.split(key, 3)
    # snn.Convolution(in, out, k, 0.8, 0.05): weights ~ N(mean=0.8, std=0.05)
    conv1_w = 0.8 + 0.05 * jax.random.normal(k1, (C1, Cin, H, W), jnp.float32)
    conv3_w = 0.8 + 0.05 * jax.random.normal(k2, (Cout, C1, 1, 1), jnp.float32)
    # sparse binary spike waves (temporal coding); sample 0 is all-zero to exercise the
    # "no winner -> -1" path.
    x = (jax.random.uniform(k3, (B, T, Cin, H, W)) < 0.05).astype(jnp.float32)
    x = x.at[0].set(0.0)

    # self.conv1_t = 15 * (H*W / (5*5)) * 0.35 * 0.16, scaled to this field size
    conv1_t = 15.0 * (H * W / (5 * 5)) * 0.35 * 0.16

    w1p, w3p = prepare_weights(conv1_w, conv3_w)        # one-time prep, hoisted out of forward
    c1p = w1p.shape[1]

    spk1, pot1 = mozafari_forward(x, w1p, w3p, conv1_t, max_layer=1, n_classes=Cout)
    decision = mozafari_forward(x, w1p, w3p, conv1_t, max_layer=3, n_classes=Cout)
    jax.block_until_ready((spk1, pot1, decision))

    assert spk1.shape == (B, T, c1p, 1, 1) and pot1.shape == (B, T, c1p, 1, 1)
    assert spk1.dtype == jnp.bfloat16 and pot1.dtype == jnp.float32
    assert decision.shape == (B,) and decision.dtype == jnp.int32

    # --- correctness check against the pure-JAX reference (same bf16-rounded weights) ---
    pot1_raw, pot1_ref, spk1_ref, total_ref = _reference(x, w1p, w3p, conv1_t, C1, Cout)
    spk1_full = spk1.reshape(B, T, c1p).astype(jnp.float32)
    pot1_full = pot1.reshape(B, T, c1p)
    assert bool(jnp.all(spk1_full[:, :, C1:] == 0.0))       # pad lanes stay silent
    assert bool(jnp.all(pot1_full[:, :, C1:] == 0.0))
    spk1_k = spk1_full[:, :, :C1]
    pot1_k = pot1_full[:, :, :C1]
    safe = jnp.abs(pot1_raw - conv1_t) > 1e-2                # ignore razor-thin threshold ties
    assert bool(jnp.all(jnp.where(safe, spk1_k == spk1_ref, True)))
    assert bool(jnp.all(jnp.where(
        safe, jnp.abs(pot1_k - pot1_ref) <= 1e-3 + 1e-3 * jnp.abs(pot1_ref), True)))
    # kernel's winner must be a (near-)maximizer of the reference totals; zero sample -> -1
    best = jnp.max(total_ref, axis=1)
    picked = jnp.take_along_axis(total_ref, jnp.clip(decision, 0, Cout - 1)[:, None], axis=1)[:, 0]
    ok = jnp.where(decision >= 0, picked >= best - 0.1, best == 0.0)
    ok = ok & jnp.where(best == 0.0, decision == -1, True)
    assert bool(jnp.all(ok))
    assert int(decision[0]) == -1

    print("KERNEL_OK")
</pallas_src>

<mosaic_0001>
module attributes {stable_mosaic.version = 11 : i64} {
  func.func @_layer1_kernel(%arg0: i32, %arg1: memref<1x1xf32, #tpu.memory_space<smem>>, %arg2: memref<128x256xf32, #tpu.memory_space<vmem>>, %arg3: memref<256x128xbf16, #tpu.memory_space<vmem>>, %arg4: memref<128x128xbf16, #tpu.memory_space<vmem>>, %arg5: memref<128x128xf32, #tpu.memory_space<vmem>>) attributes {dimension_semantics = [#tpu.dimension_semantics<parallel>], iteration_bounds = array<i64: 2>, scalar_prefetch = 0 : i64, scratch_operands = 0 : i64, tpu.core_type = #tpu.core_type<tc>, window_params = [{transform_indices = @transform_0, window_bounds = array<i64: 1, 1>}, {transform_indices = @transform_1, window_bounds = array<i64: 128, 256>}, {pipeline_mode = #tpu.pipeline_mode<synchronous>, transform_indices = @transform_2, window_bounds = array<i64: 256, 128>}, {transform_indices = @transform_3, window_bounds = array<i64: 128, 128>}, {transform_indices = @transform_4, window_bounds = array<i64: 128, 128>}]} {
    %c0 = arith.constant 0 : index
    %c0_0 = arith.constant 0 : index
    %0 = memref.load %arg1[%c0, %c0_0] : memref<1x1xf32, #tpu.memory_space<smem>>
    %c0_1 = arith.constant 0 : index
    %c0_2 = arith.constant 0 : index
    %1 = vector.load %arg2[%c0_1, %c0_2] : memref<128x256xf32, #tpu.memory_space<vmem>>, vector<128x256xf32>
    %2 = arith.truncf %1 : vector<128x256xf32> to vector<128x256xbf16>
    %c0_3 = arith.constant 0 : index
    %c0_4 = arith.constant 0 : index
    %3 = vector.load %arg3[%c0_3, %c0_4] : memref<256x128xbf16, #tpu.memory_space<vmem>>, vector<256x128xbf16>
    %cst = arith.constant dense<0.000000e+00> : vector<128x128xf32>
    %4 = tpu.matmul %2, %3, %cst {dimension_numbers = #tpu.dot_dimension_numbers<[1], [0], [0], [1], [0, 0, 1, 1], [], []>} : vector<128x256xbf16>, vector<256x128xbf16>, vector<128x128xf32> -> vector<128x128xf32>
    %5 = vector.broadcast %0 : f32 to vector<128x128xf32>
    %6 = arith.cmpf ogt, %4, %5 : vector<128x128xf32>
    %cst_5 = arith.constant 0.000000e+00 : f32
    %7 = vector.broadcast %cst_5 : f32 to vector<128x128xf32>
    %8 = arith.select %6, %4, %7 : vector<128x128xi1>, vector<128x128xf32>
    %c0_6 = arith.constant 0 : index
    %c0_7 = arith.constant 0 : index
    %9 = vector.load %arg5[%c0_6, %c0_7] : memref<128x128xf32, #tpu.memory_space<vmem>>, vector<128x128xf32>
    tpu.vector_store %arg5[%c0_6, %c0_7], %8 {strides = array<i32>} : memref<128x128xf32, #tpu.memory_space<vmem>>, vector<128x128xf32>,
    %10 = arith.extui %6 : vector<128x128xi1> to vector<128x128xi32>
    %11 = arith.sitofp %10 : vector<128x128xi32> to vector<128x128xf32>
    %12 = arith.truncf %11 : vector<128x128xf32> to vector<128x128xbf16>
    %c0_8 = arith.constant 0 : index
    %c0_9 = arith.constant 0 : index
    %13 = vector.load %arg4[%c0_8, %c0_9] : memref<128x128xbf16, #tpu.memory_space<vmem>>, vector<128x128xbf16>
    tpu.vector_store %arg4[%c0_8, %c0_9], %12 {strides = array<i32>} : memref<128x128xbf16, #tpu.memory_space<vmem>>, vector<128x128xbf16>,
    return
  }
  func.func @transform_0(%arg0: i32) -> (i32, i32) {
    %c0_i32 = arith.constant 0 : i32
    %c0_i32_0 = arith.constant 0 : i32
    %c0_i32_1 = arith.constant 0 : i32
    return %c0_i32, %c0_i32_0 : i32, i32
  }
  func.func @transform_1(%arg0: i32) -> (i32, i32) {
    %c0_i32 = arith.constant 0 : i32
    %c0_i32_0 = arith.constant 0 : i32
    return %arg0, %c0_i32 : i32, i32
  }
  func.func @transform_2(%arg0: i32) -> (i32, i32) {
    %c0_i32 = arith.constant 0 : i32
    %c0_i32_0 = arith.constant 0 : i32
    %c0_i32_1 = arith.constant 0 : i32
    return %c0_i32, %c0_i32_0 : i32, i32
  }
  func.func @transform_3(%arg0: i32) -> (i32, i32) {
    %c0_i32 = arith.constant 0 : i32
    %c0_i32_0 = arith.constant 0 : i32
    return %arg0, %c0_i32 : i32, i32
  }
  func.func @transform_4(%arg0: i32) -> (i32, i32) {
    %c0_i32 = arith.constant 0 : i32
    %c0_i32_0 = arith.constant 0 : i32
    return %arg0, %c0_i32 : i32, i32
  }
}

</mosaic_0001>

<llo_original>
// kernel: mozafari_layer1.1
$region0: #{mozafari_layer1.1}
  #allocation0 [shape = 'u32[]', space=smem, size = 0x4, offset = 0x4, fixed_abs, tag = 'smem constant byte address 0x4 - core index']
  #allocation1 [shape = 'u32[72,128]{1,0:T(1,128)}', space=vmem, size = 0x9000, scoped, tag = 'internal scratch']
  #allocation2 [shape = 'f32[1,1]{1,0:T(1,128)S(6)}', space=smem, size = 0x200, scoped, tag = 'scoped memory for mozafari_layer1.1']
  %s0 = inlined_call_operand.<no memory space> [shape: f32[1,1], index: 0, kind: input, shape index: {}]
  %s1 = inlined_call_operand.vmem [shape: f32[256,256], index: 1, kind: input, shape index: {}]
  %s2 = inlined_call_operand.vmem [shape: bf16[256,128], index: 2, kind: input, shape index: {}]
  %s3 = inlined_call_operand.hbm [shape: bf16[256,128], index: 3, kind: output, shape index: {0}]
  %s4 = inlined_call_operand.hbm [shape: f32[256,128], index: 4, kind: output, shape index: {1}]
  %5 = xla_tuple %s3, %s4
  %s6 = sld [smem:[#allocation0]]
  $region53: #{mozafari_layer1.1} parent=0
    _
  %s8 = ssub.s32 1, %s6
  %s9 = scalar_select 0, %s8, %s6
  %10 = sst [smem:[#allocation2]] %s0
  $region1: #{mozafari_layer1.1} parent=0
    #allocation3 [shape = 'u8[65536]{0}', space=vmem, size = 0x10000, scoped, tag = 'output window, operand 0']
    #allocation4 [shape = 's32[2]{0}', space=sflag, size = 0x8, scoped, tag = 'scoped memory for mozafari_layer1.1']
    #allocation5 [shape = 'u8[131072]{0}', space=vmem, size = 0x20000, scoped, tag = 'output window, operand 1']
    #allocation6 [shape = 's32[2]{0}', space=sflag, size = 0x8, scoped, tag = 'scoped memory for mozafari_layer1.1']
    %11 = vsyncpa [#allocation4], 0
    %s12 = scalar_lea.sflag [#allocation4], 1
    %13 = vsyncpa %s12, 0
    %14 = vsyncpa [#allocation6], 0
    %s15 = scalar_lea.sflag [#allocation6], 1
    %16 = vsyncpa %s15, 0
    loop: start=0, step=1, limit=4
    $region2: #{mozafari_layer1.1} parent=1 // loop_pre_header
      _
    $region3: #{mozafari_layer1.1} parent=1 // loop_header
      %s18 = sphi 0, %s22
      %p19 = scmp.ge.s32.totalorder %s18, 4
      %s26 = sphi 0, %s26
      %s28 = sphi 0, %s26
      %s29 = sphi 0, %s28
      %s43 = sphi 0, %s29
      %s49 = sphi 0, %s51
      %s52 = sphi 0, %s49
      %s53 = sphi 0, %s52
      %s69 = sphi 0, %s53
      %s73 = sphi 0, %s73
      %s75 = sphi 0, %s73
      %s76 = sphi 0, %s75
      %s90 = sphi 0, %s76
      %s96 = sphi 0, %s98
      %s99 = sphi 0, %s96
      %s100 = sphi 0, %s99
      %s116 = sphi 0, %s100
      %s122 = sphi 0, %s124
      %s125 = sphi 0, %s122
      %s126 = sphi 0, %s125
      %s142 = sphi 0, %s126
    $region4: #{mozafari_layer1.1} parent=1 // loop_header_branch
      %21 = sbr.rel (%p19) target = $region8
    $region5: #{mozafari_layer1.1} parent=1 // loop_body
      %s23 = ssub.s32 %s18, 1
      %s24 = ssub.s32 %s18, 2
      %s25 = sadd.s32 %s18, 1
      %s27 = sadd.s32 %s26, 1
      %p30 = scmp.eq.s32.totalorder %s18, 1
      %p31 = scmp.ne.s32.totalorder %s26, %s28
      %p32 = scmp.eq.s32.totalorder %s18, 0
      %p33 = por %p31, %p32
      %p34 = scmp.ne.s32.totalorder %s26, %s28
      %p35 = scmp.eq.s32.totalorder %s23, 1
      %p36 = por %p34, %p35
      %p37 = scmp.ne.s32.totalorder %s28, %s29
      %p38 = scmp.eq.s32.totalorder %s23, 0
      %p39 = por %p37, %p38
      %p40 = scmp.ne.s32.totalorder %s28, %s29
      %p41 = scmp.eq.s32.totalorder %s24, 1
      %p42 = por %p40, %p41
      %p44 = scmp.ne.s32.totalorder %s29, %s43
      %p45 = scmp.eq.s32.totalorder %s24, 0
      %p46 = por %p44, %p45
      %s47 = ssub.s32 %s18, %s25
      %p48 = scmp.eq.s32.totalorder %s47, 0
      %s50 = sadd.s32 %s49, 1
      %s51 = scalar_select %p48, %s49, %s50
      %p54 = pneg %p48
      %p55 = scmp.eq.s32.totalorder %s18, 1
      %p56 = por %p54, %p55
      %p57 = scmp.ne.s32.totalorder %s49, %s52
      %p58 = scmp.eq.s32.totalorder %s18, 0
      %p59 = por %p57, %p58
      %p60 = scmp.ne.s32.totalorder %s49, %s52
      %p61 = scmp.eq.s32.totalorder %s23, 1
      %p62 = por %p60, %p61
      %p63 = scmp.ne.s32.totalorder %s52, %s53
      %p64 = scmp.eq.s32.totalorder %s23, 0
      %p65 = por %p63, %p64
      %p66 = scmp.ne.s32.totalorder %s52, %s53
      %p67 = scmp.eq.s32.totalorder %s24, 1
      %p68 = por %p66, %p67
      %p70 = scmp.ne.s32.totalorder %s53, %s69
      %p71 = scmp.eq.s32.totalorder %s24, 0
      %p72 = por %p70, %p71
      %s74 = sadd.s32 %s73, 1
      %p77 = scmp.eq.s32.totalorder %s18, 1
      %p78 = scmp.ne.s32.totalorder %s73, %s75
      %p79 = scmp.eq.s32.totalorder %s18, 0
      %p80 = por %p78, %p79
      %p81 = scmp.ne.s32.totalorder %s73, %s75
      %p82 = scmp.eq.s32.totalorder %s23, 1
      %p83 = por %p81, %p82
      %p84 = scmp.ne.s32.totalorder %s75, %s76
      %p85 = scmp.eq.s32.totalorder %s23, 0
      %p86 = por %p84, %p85
      %p87 = scmp.ne.s32.totalorder %s75, %s76
      %p88 = scmp.eq.s32.totalorder %s24, 1
      %p89 = por %p87, %p88
      %p91 = scmp.ne.s32.totalorder %s76, %s90
      %p92 = scmp.eq.s32.totalorder %s24, 0
      %p93 = por %p91, %p92
      %s94 = ssub.s32 %s18, %s25
      %p95 = scmp.eq.s32.totalorder %s94, 0
      %s97 = sadd.s32 %s96, 1
      %s98 = scalar_select %p95, %s96, %s97
      %p101 = pneg %p95
      %p102 = scmp.eq.s32.totalorder %s18, 1
      %p103 = por %p101, %p102
      %p104 = scmp.ne.s32.totalorder %s96, %s99
      %p105 = scmp.eq.s32.totalorder %s18, 0
      %p106 = por %p104, %p105
      %p107 = scmp.ne.s32.totalorder %s96, %s99
      %p108 = scmp.eq.s32.totalorder %s23, 1
      %p109 = por %p107, %p108
      %p110 = scmp.ne.s32.totalorder %s99, %s100
      %p111 = scmp.eq.s32.totalorder %s23, 0
      %p112 = por %p110, %p111
      %p113 = scmp.ne.s32.totalorder %s99, %s100
      %p114 = scmp.eq.s32.totalorder %s24, 1
      %p115 = por %p113, %p114
      %p117 = scmp.ne.s32.totalorder %s100, %s116
      %p118 = scmp.eq.s32.totalorder %s24, 0
      %p119 = por %p117, %p118
      %s120 = ssub.s32 %s18, %s25
      %p121 = scmp.eq.s32.totalorder %s120, 0
      %s123 = sadd.s32 %s122, 1
      %s124 = scalar_select %p121, %s122, %s123
      %p127 = pneg %p121
      %p128 = scmp.eq.s32.totalorder %s18, 1
      %p129 = por %p127, %p128
      %p130 = scmp.ne.s32.totalorder %s122, %s125
      %p131 = scmp.eq.s32.totalorder %s18, 0
      %p132 = por %p130, %p131
      %p133 = scmp.ne.s32.totalorder %s122, %s125
      %p134 = scmp.eq.s32.totalorder %s23, 1
      %p135 = por %p133, %p134
      %p136 = scmp.ne.s32.totalorder %s125, %s126
      %p137 = scmp.eq.s32.totalorder %s23, 0
      %p138 = por %p136, %p137
      %p139 = scmp.ne.s32.totalorder %s125, %s126
      %p140 = scmp.eq.s32.totalorder %s24, 1
      %p141 = por %p139, %p140
      %p143 = scmp.ne.s32.totalorder %s126, %s142
      %p144 = scmp.eq.s32.totalorder %s24, 0
      %p145 = por %p143, %p144
      %p146 = scmp.le.s32.totalorder 1, %s18
      %p147 = scmp.lt.s32.totalorder %s18, 3
      %p148 = pnand %p146, %p147
      %p149 = pneg %p148
      // Predicated region
      $region9: #{mozafari_layer1.1} parent=5 // pred_check
        _
      $region10: #{mozafari_layer1.1} parent=5 // pred_check_branch
        %151 = sbr.rel (%p148) target = $region12
      $region11: #{mozafari_layer1.1} parent=5 // pred_region
        %s152 = ssub.s32 %s18, 1
        // Predicated region
        $region13: #{mozafari_layer1.1} parent=11 // pred_check
          %p153 = pneg %p39
        $region14: #{mozafari_layer1.1} parent=11 // pred_check_branch
          %155 = sbr.rel (%p153) target = $region16
        $region15: #{mozafari_layer1.1} parent=11 // pred_region
          _
        $region16: #{mozafari_layer1.1} parent=11 // pred_fallthru
          _
        // Predicated region
        $region17: #{mozafari_layer1.1} parent=11 // pred_check
          %p156 = pneg %p86
        $region18: #{mozafari_layer1.1} parent=11 // pred_check_branch
          %158 = sbr.rel (%p156) target = $region20
        $region19: #{mozafari_layer1.1} parent=11 // pred_region
          _
        $region20: #{mozafari_layer1.1} parent=11 // pred_fallthru
          _
      $region12: #{mozafari_layer1.1} parent=5 // pred_fallthru
        _
      %p159 = scmp.lt.s32.totalorder %s18, 2
      // Predicated region
      $region21: #{mozafari_layer1.1} parent=5 // pred_check
        %p160 = pneg %p159
      $region22: #{mozafari_layer1.1} parent=5 // pred_check_branch
        %162 = sbr.rel (%p160) target = $region24
      $region23: #{mozafari_layer1.1} parent=5 // pred_region
        // Predicated region
        $region25: #{mozafari_layer1.1} parent=23 // pred_check
          %p163 = pneg %p59
        $region26: #{mozafari_layer1.1} parent=23 // pred_check_branch
          %165 = sbr.rel (%p163) target = $region28
        $region27: #{mozafari_layer1.1} parent=23 // pred_region
          %s166 = smul.u32 16, %s18
          %p167 = scmp.lt.s32.totalorder %s166, 31
          %s168 = scalar_select %p167, %s166, 31
          %s169 = smul.addr %s168, 2
          %s170 = smul.addr %s169, 8
          %s171 = scalar_lea.vmem %s1, %s170
          %s172 = smul.u32 16, %s18
        $region28: #{mozafari_layer1.1} parent=23 // pred_fallthru
          _
      $region24: #{mozafari_layer1.1} parent=5 // pred_fallthru
        _
      %p173 = scmp.le.s32.totalorder 1, %s18
      %p174 = scmp.lt.s32.totalorder %s18, 3
      %p175 = pnand %p173, %p174
      %p176 = pneg %p175
      // Predicated region
      $region29: #{mozafari_layer1.1} parent=5 // pred_check
        _
      $region30: #{mozafari_layer1.1} parent=5 // pred_check_branch
        %178 = sbr.rel (%p175) target = $region32
      $region31: #{mozafari_layer1.1} parent=5 // pred_region
        %s179 = ssub.s32 %s18, 1
        %p180 = pneg %p39
        %p181 = pneg %p36
        %s182 = smul.u32 16, %s23
        %p183 = scmp.lt.s32.totalorder %s182, 31
        %s184 = scalar_select %p183, %s182, 31
        %s185 = smul.addr %s184, 2
        %s186 = smul.addr %s185, 8
        %s187 = scalar_lea.vmem %s1, %s186
        %p188 = pneg %p65
        %p189 = pneg %p62
        %p190 = pneg %p86
        %p191 = pneg %p83
        %p192 = pneg %p112
        %p193 = pneg %p109
        %s194 = sand.u32 %s99, 1
        %s195 = scalar_lea.sflag [#allocation4], %s194
        %s196 = sand.u32 %s99, 1
        %s197 = smul.addr %s196, 64
        %s198 = scalar_lea.vmem [#allocation3], %s197
        %p199 = pneg %p138
        %p200 = pneg %p135
        %s201 = sand.u32 %s125, 1
        %s202 = scalar_lea.sflag [#allocation6], %s201
        %s203 = sand.u32 %s125, 1
        %s204 = smul.addr %s203, 128
        %s205 = scalar_lea.vmem [#allocation5], %s204
        %s206 = smul.u32 16, %s23
        %p207 = scmp.lt.s32.totalorder %s206, 31
        %s208 = scalar_select %p207, %s206, 31
        %s209 = smul.addr %s208, 2
        %s210 = smul.addr %s209, 8
        %s211 = scalar_lea.vmem %s1, %s210
        %s212 = smul.u32 16, %s23
        %s213 = smul.u32 16, %s23
        %s214 = smul.u32 16, %s23
        %s215 = sld [smem:[#allocation2]]
        %v216 = vld [vmem:[%s211] sm:$0xff]
        %v217 = vld [vmem:[%s211 + $0x8] sm:$0xff]
        %v218 = vld [vmem:[%s211 + $0x10] sm:$0xff]
        %v219 = vld [vmem:[%s211 + $0x18] sm:$0xff]
        %v220 = vld [vmem:[%s211 + $0x20] sm:$0xff]
        %v221 = vld [vmem:[%s211 + $0x28] sm:$0xff]
        %v222 = vld [vmem:[%s211 + $0x30] sm:$0xff]
        %v223 = vld [vmem:[%s211 + $0x38] sm:$0xff]
        %v224 = vld [vmem:[%s211 + $0x40] sm:$0xff]
        %v225 = vld [vmem:[%s211 + $0x48] sm:$0xff]
        %v226 = vld [vmem:[%s211 + $0x50] sm:$0xff]
        %v227 = vld [vmem:[%s211 + $0x58] sm:$0xff]
        %v228 = vld [vmem:[%s211 + $0x60] sm:$0xff]
        %v229 = vld [vmem:[%s211 + $0x68] sm:$0xff]
        %v230 = vld [vmem:[%s211 + $0x70] sm:$0xff]
        %v231 = vld [vmem:[%s211 + $0x78] sm:$0xff]
        %v232 = vld [vmem:[%s211 + $0x80] sm:$0xff]
        %v233 = vld [vmem:[%s211 + $0x88] sm:$0xff]
        %v234 = vld [vmem:[%s211 + $0x90] sm:$0xff]
        %v235 = vld [vmem:[%s211 + $0x98] sm:$0xff]
        %v236 = vld [vmem:[%s211 + $0xa0] sm:$0xff]
        %v237 = vld [vmem:[%s211 + $0xa8] sm:$0xff]
        %v238 = vld [vmem:[%s211 + $0xb0] sm:$0xff]
        %v239 = vld [vmem:[%s211 + $0xb8] sm:$0xff]
        %v240 = vld [vmem:[%s211 + $0xc0] sm:$0xff]
        %v241 = vld [vmem:[%s211 + $0xc8] sm:$0xff]
        %v242 = vld [vmem:[%s211 + $0xd0] sm:$0xff]
        %v243 = vld [vmem:[%s211 + $0xd8] sm:$0xff]
        %v244 = vld [vmem:[%s211 + $0xe0] sm:$0xff]
        %v245 = vld [vmem:[%s211 + $0xe8] sm:$0xff]
        %v246 = vld [vmem:[%s211 + $0xf0] sm:$0xff]
        %v247 = vld [vmem:[%s211 + $0xf8] sm:$0xff]
        %v248 = vpack.c.bf16 %v218, %v216
        %v249 = vpack.c.bf16 %v219, %v217
        %v250 = vpack.c.bf16 %v222, %v220
        %v251 = vpack.c.bf16 %v223, %v221
        %v252 = vpack.c.bf16 %v226, %v224
        %v253 = vpack.c.bf16 %v227, %v225
        %v254 = vpack.c.bf16 %v230, %v228
        %v255 = vpack.c.bf16 %v231, %v229
        %v256 = vpack.c.bf16 %v234, %v232
        %v257 = vpack.c.bf16 %v235, %v233
        %v258 = vpack.c.bf16 %v238, %v236
        %v259 = vpack.c.bf16 %v239, %v237
        %v260 = vpack.c.bf16 %v242, %v240
        %v261 = vpack.c.bf16 %v243, %v241
        %v262 = vpack.c.bf16 %v246, %v244
        %v263 = vpack.c.bf16 %v247, %v245
        %v264 = vld [vmem:[%s2] sm:$0xf]
        %v265 = vld [vmem:[%s2 + $0x4] sm:$0xf]
        %v266 = vld [vmem:[%s2 + $0x8] sm:$0xf]
        %v267 = vld [vmem:[%s2 + $0xc] sm:$0xf]
        %v268 = vld [vmem:[%s2 + $0x10] sm:$0xf]
        %v269 = vld [vmem:[%s2 + $0x14] sm:$0xf]
        %v270 = vld [vmem:[%s2 + $0x18] sm:$0xf]
        %v271 = vld [vmem:[%s2 + $0x1c] sm:$0xf]
        %v272 = vld [vmem:[%s2 + $0x20] sm:$0xf]
        %v273 = vld [vmem:[%s2 + $0x24] sm:$0xf]
        %v274 = vld [vmem:[%s2 + $0x28] sm:$0xf]
        %v275 = vld [vmem:[%s2 + $0x2c] sm:$0xf]
        %v276 = vld [vmem:[%s2 + $0x30] sm:$0xf]
        %v277 = vld [vmem:[%s2 + $0x34] sm:$0xf]
        %v278 = vld [vmem:[%s2 + $0x38] sm:$0xf]
        %v279 = vld [vmem:[%s2 + $0x3c] sm:$0xf]
        %v280 = vld [vmem:[%s2 + $0x40] sm:$0xf]
        %v281 = vld [vmem:[%s2 + $0x44] sm:$0xf]
        %v282 = vld [vmem:[%s2 + $0x48] sm:$0xf]
        %v283 = vld [vmem:[%s2 + $0x4c] sm:$0xf]
        %v284 = vld [vmem:[%s2 + $0x50] sm:$0xf]
        %v285 = vld [vmem:[%s2 + $0x54] sm:$0xf]
        %v286 = vld [vmem:[%s2 + $0x58] sm:$0xf]
        %v287 = vld [vmem:[%s2 + $0x5c] sm:$0xf]
        %v288 = vld [vmem:[%s2 + $0x60] sm:$0xf]
        %v289 = vld [vmem:[%s2 + $0x64] sm:$0xf]
        %v290 = vld [vmem:[%s2 + $0x68] sm:$0xf]
        %v291 = vld [vmem:[%s2 + $0x6c] sm:$0xf]
        %v292 = vld [vmem:[%s2 + $0x70] sm:$0xf]
        %v293 = vld [vmem:[%s2 + $0x74] sm:$0xf]
        %v294 = vld [vmem:[%s2 + $0x78] sm:$0xf]
        %v295 = vld [vmem:[%s2 + $0x7c] sm:$0xf]
        %v328 = vunpack.c.l.b16 %v264
        %v329 = vunpack.c.l.b16 %v265
        %v330 = vunpack.c.l.b16 %v266
        %v331 = vunpack.c.l.b16 %v267
        %v332 = vunpack.c.l.b16 %v268
        %v333 = vunpack.c.l.b16 %v269
        %v334 = vunpack.c.l.b16 %v270
        %v335 = vunpack.c.l.b16 %v271
        %v336 = vunpack.c.l.b16 %v272
        %v337 = vunpack.c.l.b16 %v273
        %v338 = vunpack.c.l.b16 %v274
        %v339 = vunpack.c.l.b16 %v275
        %v340 = vunpack.c.l.b16 %v276
        %v341 = vunpack.c.l.b16 %v277
        %v342 = vunpack.c.l.b16 %v278
        %v343 = vunpack.c.l.b16 %v279
        %v344 = vunpack.c.l.b16 %v280
        %v345 = vunpack.c.l.b16 %v281
        %v346 = vunpack.c.l.b16 %v282
        %v347 = vunpack.c.l.b16 %v283
        %v348 = vunpack.c.l.b16 %v284
        %v349 = vunpack.c.l.b16 %v285
        %v350 = vunpack.c.l.b16 %v286
        %v351 = vunpack.c.l.b16 %v287
        %v352 = vunpack.c.l.b16 %v288
        %v353 = vunpack.c.l.b16 %v289
        %v354 = vunpack.c.l.b16 %v290
        %v355 = vunpack.c.l.b16 %v291
        %v356 = vunpack.c.l.b16 %v292
        %v357 = vunpack.c.l.b16 %v293
        %v358 = vunpack.c.l.b16 %v294
        %v359 = vunpack.c.l.b16 %v295
        %v360 = vpack.c.b16 %v329, %v328
        %v361 = vpack.c.b16 %v331, %v330
        %v362 = vpack.c.b16 %v333, %v332
        %v363 = vpack.c.b16 %v335, %v334
        %v364 = vpack.c.b16 %v337, %v336
        %v365 = vpack.c.b16 %v339, %v338
        %v366 = vpack.c.b16 %v341, %v340
        %v367 = vpack.c.b16 %v343, %v342
        %v368 = vpack.c.b16 %v345, %v344
        %v369 = vpack.c.b16 %v347, %v346
        %v370 = vpack.c.b16 %v349, %v348
        %v371 = vpack.c.b16 %v351, %v350
        %v372 = vpack.c.b16 %v353, %v352
        %v373 = vpack.c.b16 %v355, %v354
        %v374 = vpack.c.b16 %v357, %v356
        %v375 = vpack.c.b16 %v359, %v358
        %392 = vmatpush.bf16.msra.mxu0 %v367
        %393 = vmatpush.bf16.msra.mxu0 %v366
        %394 = vmatpush.bf16.msra.mxu0 %v365
        %395 = vmatpush.bf16.msra.mxu0 %v364
        %396 = vmatpush.bf16.msra.mxu0 %v363
        %397 = vmatpush.bf16.msra.mxu0 %v362
        %398 = vmatpush.bf16.msra.mxu0 %v361
        %399 = vmatpush.bf16.msra.mxu0 %v360
        %400 = vmatmul.bf16.gmra.mxu0 %v248
        %v401 = vpop.f32.mrf.mxu0
        %v402 = vadd.f32 0.0, %v401
        %v403 = vpop.f32.mrf.mxu0
        %v404 = vadd.f32 0.0, %v403
        %405 = vmatmul.bf16.gmra.mxu0 %v250
        %v406 = vpop.f32.mrf.mxu0
        %v407 = vadd.f32 0.0, %v406
        %v408 = vpop.f32.mrf.mxu0
        %v409 = vadd.f32 0.0, %v408
        %410 = vmatmul.bf16.gmra.mxu0 %v252
        %v411 = vpop.f32.mrf.mxu0
        %v412 = vadd.f32 0.0, %v411
        %v413 = vpop.f32.mrf.mxu0
        %v414 = vadd.f32 0.0, %v413
        %415 = vmatmul.bf16.gmra.mxu0 %v254
        %v416 = vpop.f32.mrf.mxu0
        %v417 = vadd.f32 0.0, %v416
        %v418 = vpop.f32.mrf.mxu0
        %v419 = vadd.f32 0.0, %v418
        %420 = vmatmul.bf16.gmra.mxu0 %v256
        %v421 = vpop.f32.mrf.mxu0
        %v422 = vadd.f32 0.0, %v421
        %v423 = vpop.f32.mrf.mxu0
        %v424 = vadd.f32 0.0, %v423
        %425 = vmatmul.bf16.gmra.mxu0 %v258
        %v426 = vpop.f32.mrf.mxu0
        %v427 = vadd.f32 0.0, %v426
        %v428 = vpop.f32.mrf.mxu0
        %v429 = vadd.f32 0.0, %v428
        %430 = vmatmul.bf16.gmra.mxu0 %v260
        %v431 = vpop.f32.mrf.mxu0
        %v432 = vadd.f32 0.0, %v431
        %v433 = vpop.f32.mrf.mxu0
        %v434 = vadd.f32 0.0, %v433
        %435 = vmatmul.bf16.gmra.mxu0 %v262
        %v436 = vpop.f32.mrf.mxu0
        %v437 = vadd.f32 0.0, %v436
        %v438 = vpop.f32.mrf.mxu0
        %v439 = vadd.f32 0.0, %v438
        %440 = vdwg.mxu0
        %441 = vmatpush.bf16.msra.mxu0 %v375
        %442 = vmatpush.bf16.msra.mxu0 %v374
        %443 = vmatpush.bf16.msra.mxu0 %v373
        %444 = vmatpush.bf16.msra.mxu0 %v372
        %445 = vmatpush.bf16.msra.mxu0 %v371
        %446 = vmatpush.bf16.msra.mxu0 %v370
        %447 = vmatpush.bf16.msra.mxu0 %v369
        %448 = vmatpush.bf16.msra.mxu0 %v368
        %449 = vmatmul.bf16.gmra.mxu0 %v249
        %v450 = vpop.f32.mrf.mxu0
        %v451 = vadd.f32 %v402, %v450
        %v452 = vpop.f32.mrf.mxu0
        %v453 = vadd.f32 %v404, %v452
        %454 = vmatmul.bf16.gmra.mxu0 %v251
        %v455 = vpop.f32.mrf.mxu0
        %v456 = vadd.f32 %v407, %v455
        %v457 = vpop.f32.mrf.mxu0
        %v458 = vadd.f32 %v409, %v457
        %459 = vmatmul.bf16.gmra.mxu0 %v253
        %v460 = vpop.f32.mrf.mxu0
        %v461 = vadd.f32 %v412, %v460
        %v462 = vpop.f32.mrf.mxu0
        %v463 = vadd.f32 %v414, %v462
        %464 = vmatmul.bf16.gmra.mxu0 %v255
        %v465 = vpop.f32.mrf.mxu0
        %v466 = vadd.f32 %v417, %v465
        %v467 = vpop.f32.mrf.mxu0
        %v468 = vadd.f32 %v419, %v467
        %469 = vmatmul.bf16.gmra.mxu0 %v257
        %v470 = vpop.f32.mrf.mxu0
        %v471 = vadd.f32 %v422, %v470
        %v472 = vpop.f32.mrf.mxu0
        %v473 = vadd.f32 %v424, %v472
        %474 = vmatmul.bf16.gmra.mxu0 %v259
        %v475 = vpop.f32.mrf.mxu0
        %v476 = vadd.f32 %v427, %v475
        %v477 = vpop.f32.mrf.mxu0
        %v478 = vadd.f32 %v429, %v477
        %479 = vmatmul.bf16.gmra.mxu0 %v261
        %v480 = vpop.f32.mrf.mxu0
        %v481 = vadd.f32 %v432, %v480
        %v482 = vpop.f32.mrf.mxu0
        %v483 = vadd.f32 %v434, %v482
        %484 = vmatmul.bf16.gmra.mxu0 %v263
        %v485 = vpop.f32.mrf.mxu0
        %v486 = vadd.f32 %v437, %v485
        %v487 = vpop.f32.mrf.mxu0
        %v488 = vadd.f32 %v439, %v487
        %489 = vdwg.mxu0
        %v490 = vstv %s215
        %vm491 = vcmp.gt.f32.partialorder %v451, %v490
        %vm492 = vcmp.gt.f32.partialorder %v453, %v490
        %vm493 = vcmp.gt.f32.partialorder %v456, %v490
        %vm494 = vcmp.gt.f32.partialorder %v458, %v490
        %vm495 = vcmp.gt.f32.partialorder %v461, %v490
        %vm496 = vcmp.gt.f32.partialorder %v463, %v490
        %vm497 = vcmp.gt.f32.partialorder %v466, %v490
        %vm498 = vcmp.gt.f32.partialorder %v468, %v490
        %vm499 = vcmp.gt.f32.partialorder %v471, %v490
        %vm500 = vcmp.gt.f32.partialorder %v473, %v490
        %vm501 = vcmp.gt.f32.partialorder %v476, %v490
        %vm502 = vcmp.gt.f32.partialorder %v478, %v490
        %vm503 = vcmp.gt.f32.partialorder %v481, %v490
        %vm504 = vcmp.gt.f32.partialorder %v483, %v490
        %vm505 = vcmp.gt.f32.partialorder %v486, %v490
        %vm506 = vcmp.gt.f32.partialorder %v488, %v490
        %v507 = vsel %vm491, %v451, 0.0
        %v508 = vsel %vm492, %v453, 0.0
        %v509 = vsel %vm493, %v456, 0.0
        %v510 = vsel %vm494, %v458, 0.0
        %v511 = vsel %vm495, %v461, 0.0
        %v512 = vsel %vm496, %v463, 0.0
        %v513 = vsel %vm497, %v466, 0.0
        %v514 = vsel %vm498, %v468, 0.0
        %v515 = vsel %vm499, %v471, 0.0
        %v516 = vsel %vm500, %v473, 0.0
        %v517 = vsel %vm501, %v476, 0.0
        %v518 = vsel %vm502, %v478, 0.0
        %v519 = vsel %vm503, %v481, 0.0
        %v520 = vsel %vm504, %v483, 0.0
        %v521 = vsel %vm505, %v486, 0.0
        %v522 = vsel %vm506, %v488, 0.0
        %523 = vst [vmem:[%s205] sm:$0xff] %v507
        %524 = vst [vmem:[%s205 + $0x8] sm:$0xff] %v508
        %525 = vst [vmem:[%s205 + $0x10] sm:$0xff] %v509
        %526 = vst [vmem:[%s205 + $0x18] sm:$0xff] %v510
        %527 = vst [vmem:[%s205 + $0x20] sm:$0xff] %v511
        %528 = vst [vmem:[%s205 + $0x28] sm:$0xff] %v512
        %529 = vst [vmem:[%s205 + $0x30] sm:$0xff] %v513
        %530 = vst [vmem:[%s205 + $0x38] sm:$0xff] %v514
        %531 = vst [vmem:[%s205 + $0x40] sm:$0xff] %v515
        %532 = vst [vmem:[%s205 + $0x48] sm:$0xff] %v516
        %533 = vst [vmem:[%s205 + $0x50] sm:$0xff] %v517
        %534 = vst [vmem:[%s205 + $0x58] sm:$0xff] %v518
        %535 = vst [vmem:[%s205 + $0x60] sm:$0xff] %v519
        %536 = vst [vmem:[%s205 + $0x68] sm:$0xff] %v520
        %537 = vst [vmem:[%s205 + $0x70] sm:$0xff] %v521
        %538 = vst [vmem:[%s205 + $0x78] sm:$0xff] %v522
        %v539 = vsel %vm491, 1, 0
        %v540 = vsel %vm492, 1, 0
        %v541 = vsel %vm493, 1, 0
        %v542 = vsel %vm494, 1, 0
        %v543 = vsel %vm495, 1, 0
        %v544 = vsel %vm496, 1, 0
        %v545 = vsel %vm497, 1, 0
        %v546 = vsel %vm498, 1, 0
        %v547 = vsel %vm499, 1, 0
        %v548 = vsel %vm500, 1, 0
        %v549 = vsel %vm501, 1, 0
        %v550 = vsel %vm502, 1, 0
        %v551 = vsel %vm503, 1, 0
        %v552 = vsel %vm504, 1, 0
        %v553 = vsel %vm505, 1, 0
        %v554 = vsel %vm506, 1, 0
        %v555 = vcvt.s32.f32 %v539
        %v556 = vcvt.s32.f32 %v540
        %v557 = vcvt.s32.f32 %v541
        %v558 = vcvt.s32.f32 %v542
        %v559 = vcvt.s32.f32 %v543
        %v560 = vcvt.s32.f32 %v544
        %v561 = vcvt.s32.f32 %v545
        %v562 = vcvt.s32.f32 %v546
        %v563 = vcvt.s32.f32 %v547
        %v564 = vcvt.s32.f32 %v548
        %v565 = vcvt.s32.f32 %v549
        %v566 = vcvt.s32.f32 %v550
        %v567 = vcvt.s32.f32 %v551
        %v568 = vcvt.s32.f32 %v552
        %v569 = vcvt.s32.f32 %v553
        %v570 = vcvt.s32.f32 %v554
        %v571 = vpack.c.bf16 %v555, %v555
        %v572 = vpack.c.bf16 %v556, %v556
        %v573 = vpack.c.bf16 %v557, %v557
        %v574 = vpack.c.bf16 %v558, %v558
        %v575 = vpack.c.bf16 %v559, %v559
        %v576 = vpack.c.bf16 %v560, %v560
        %v577 = vpack.c.bf16 %v561, %v561
        %v578 = vpack.c.bf16 %v562, %v562
        %v579 = vpack.c.bf16 %v563, %v563
        %v580 = vpack.c.bf16 %v564, %v564
        %v581 = vpack.c.bf16 %v565, %v565
        %v582 = vpack.c.bf16 %v566, %v566
        %v583 = vpack.c.bf16 %v567, %v567
        %v584 = vpack.c.bf16 %v568, %v568
        %v585 = vpack.c.bf16 %v569, %v569
        %v586 = vpack.c.bf16 %v570, %v570
        %587 = vst [vmem:[%s198] sm:$0xf] %v571
        %588 = vst [vmem:[%s198 + $0x4] sm:$0xf] %v572
        %589 = vst [vmem:[%s198 + $0x8] sm:$0xf] %v573
        %590 = vst [vmem:[%s198 + $0xc] sm:$0xf] %v574
        %591 = vst [vmem:[%s198 + $0x10] sm:$0xf] %v575
        %592 = vst [vmem:[%s198 + $0x14] sm:$0xf] %v576
        %593 = vst [vmem:[%s198 + $0x18] sm:$0xf] %v577
        %594 = vst [vmem:[%s198 + $0x1c] sm:$0xf] %v578
        %595 = vst [vmem:[%s198 + $0x20] sm:$0xf] %v579
        %596 = vst [vmem:[%s198 + $0x24] sm:$0xf] %v580
        %597 = vst [vmem:[%s198 + $0x28] sm:$0xf] %v581
        %598 = vst [vmem:[%s198 + $0x2c] sm:$0xf] %v582
        %599 = vst [vmem:[%s198 + $0x30] sm:$0xf] %v583
        %600 = vst [vmem:[%s198 + $0x34] sm:$0xf] %v584
        %601 = vst [vmem:[%s198 + $0x38] sm:$0xf] %v585
        %602 = vst [vmem:[%s198 + $0x3c] sm:$0xf] %v586
        %s603 = sand.u32 %s99, 1
        %s604 = scalar_lea.sflag [#allocation4], %s603
        %s605 = sand.u32 %s99, 1
        %s606 = smul.addr %s605, 64
        %s607 = scalar_lea.vmem [#allocation3], %s606
        %s608 = sand.u32 %s125, 1
        %s609 = scalar_lea.sflag [#allocation6], %s608
        %s610 = sand.u32 %s125, 1
        %s611 = smul.addr %s610, 128
        %s612 = scalar_lea.vmem [#allocation5], %s611
        // Predicated region
        $region33: #{mozafari_layer1.1} parent=31 // pred_check
          %p613 = pneg %p109
        $region34: #{mozafari_layer1.1} parent=31 // pred_check_branch
          %615 = sbr.rel (%p613) target = $region36
        $region35: #{mozafari_layer1.1} parent=31 // pred_region
          %s616 = smul.u32 16, %s23
          %618 = vsyncadd %s604, 0
          %s619 = smul.addr %s616, 4
          %s620 = scalar_lea.hbm %s3, %s619
          %s621 = sshll.u32 %s607, 4
          %s622 = int_to_ptr.vmem [resolvable:$true] %s621
          %s623 = sshll.u32 %s620, 4
          %s624 = int_to_ptr.hbm [resolvable:$true] %s623
          %629 = dma.vmem_to_hbm [thread:$0]  %s622, 1024, %s624, %s604, 64, 64, 4
        $region36: #{mozafari_layer1.1} parent=31 // pred_fallthru
          _
        // Predicated region
        $region37: #{mozafari_layer1.1} parent=31 // pred_check
          %p630 = pneg %p135
        $region38: #{mozafari_layer1.1} parent=31 // pred_check_branch
          %632 = sbr.rel (%p630) target = $region40
        $region39: #{mozafari_layer1.1} parent=31 // pred_region
          %s633 = smul.u32 16, %s23
          %635 = vsyncadd %s609, 0
          %s636 = smul.addr %s633, 8
          %s637 = scalar_lea.hbm %s4, %s636
          %s638 = sshll.u32 %s612, 4
          %s639 = int_to_ptr.vmem [resolvable:$true] %s638
          %s640 = sshll.u32 %s637, 4
          %s641 = int_to_ptr.hbm [resolvable:$true] %s640
          %646 = dma.vmem_to_hbm [thread:$0]  %s639, 2048, %s641, %s609, 128, 128, 8
        $region40: #{mozafari_layer1.1} parent=31 // pred_fallthru
          _
      $region32: #{mozafari_layer1.1} parent=5 // pred_fallthru
        _
      %p647 = scmp.le.s32.totalorder 2, %s18
      // Predicated region
      $region41: #{mozafari_layer1.1} parent=5 // pred_check
        %p648 = pneg %p647
      $region42: #{mozafari_layer1.1} parent=5 // pred_check_branch
        %650 = sbr.rel (%p648) target = $region44
      $region43: #{mozafari_layer1.1} parent=5 // pred_region
        %s651 = ssub.s32 %s18, 2
        // Predicated region
        $region45: #{mozafari_layer1.1} parent=43 // pred_check
          %p652 = pneg %p115
        $region46: #{mozafari_layer1.1} parent=43 // pred_check_branch
          %654 = sbr.rel (%p652) target = $region48
        $region47: #{mozafari_layer1.1} parent=43 // pred_region
          %s655 = sand.u32 %s100, 1
          %s656 = scalar_lea.sflag [#allocation4], %s655
          %s657 = sand.u32 %s100, 1
          %s658 = smul.addr %s657, 64
          %s659 = scalar_lea.vmem [#allocation3], %s658
          %661 = dma.done %s656, 1024
        $region48: #{mozafari_layer1.1} parent=43 // pred_fallthru
          _
        // Predicated region
        $region49: #{mozafari_layer1.1} parent=43 // pred_check
          %p662 = pneg %p141
        $region50: #{mozafari_layer1.1} parent=43 // pred_check_branch
          %664 = sbr.rel (%p662) target = $region52
        $region51: #{mozafari_layer1.1} parent=43 // pred_region
          %s665 = sand.u32 %s126, 1
          %s666 = scalar_lea.sflag [#allocation6], %s665
          %s667 = sand.u32 %s126, 1
          %s668 = smul.addr %s667, 128
          %s669 = scalar_lea.vmem [#allocation5], %s668
          %671 = dma.done %s666, 2048
        $region52: #{mozafari_layer1.1} parent=43 // pred_fallthru
          _
      $region44: #{mozafari_layer1.1} parent=5 // pred_fallthru
        _
    $region6: #{mozafari_layer1.1} parent=1 // loop_footer
      %s22 = sadd.s32 1, %s18
    $region7: #{mozafari_layer1.1} parent=1 // loop_footer_branch
      %17 = sbr.rel target = $region3
    $region8: #{mozafari_layer1.1} parent=1 // loop_exit
      _
    %672 = vsyncpa [#allocation4], 1
    %s673 = scalar_lea.sflag [#allocation4], 1
    %674 = vsyncpa %s673, 1
    %675 = vsyncpa [#allocation6], 1
    %s676 = scalar_lea.sflag [#allocation6], 1
    %677 = vsyncpa %s676, 1

</llo_original>
